<compile_context>
chip_gen: v6e
topology: v6e:2x2x1
jax: 0.10.0
libtpu: 0.0.40
codegen_flags: <defaults>
</compile_context>

<pallas_src>
import functools

import jax
import jax.numpy as jnp
from jax.experimental import pallas as pl
from jax.experimental.pallas import tpu as pltpu

_LANE = 128
_SUBLANE = 32                   # multiple of the sublane tile for f32/bf16/int8
_TILE_F32_BYTES = 2 << 20       # ~2 MiB f32 VMEM footprint per input buffer
_MAX_TB = 4096                  # hard cap on rows per tile
_VMEM_LIMIT = 48 * 1024 * 1024  # explicit scoped-VMEM request (safe on v5e/v6e/v7x)


def _cdiv(a, b):
    return -(-a // b)


def _round_up(a, m):
    return _cdiv(a, m) * m


def _focal_loss_elem(p, t, alpha, gamma):
    """Elementwise focal loss (f32 in-register; VPU ops + one log on the EUP)."""
    # u = 1 - p_t,  where p_t = p*t + (1-p)*(1-t)  =>  u = p + t - 2*p*t
    u = (p + t) - 2.0 * (p * t)
    p_t = 1.0 - u
    if float(gamma).is_integer() and gamma >= 0:
        g = int(gamma)
        if g == 0:
            fw = jnp.ones_like(u)
        else:
            fw = u
            for _ in range(g - 1):
                fw = fw * u
    else:
        # TODO(synk): non-integer gamma falls back to exp(g*log(max(u, 1e-30)))
        # on the EUP; not bit-identical to u**gamma at u == 0 (torch would NaN
        # for a negative base anyway).
        fw = jnp.exp(gamma * jnp.log(jnp.maximum(u, 1e-30)))
    # loss = -alpha_t * fw * log(clamp(p_t, 1e-8)); the negation is folded into
    # the alpha_t constants: -(alpha*t + (1-alpha)*(1-t)) = (alpha-1) + (1-2*alpha)*t
    neg_alpha_t = (alpha - 1.0) + (1.0 - 2.0 * alpha) * t
    log_pt = jnp.log(jnp.maximum(p_t, 1e-8))
    return neg_alpha_t * fw * log_pt


def _focal_sum_kernel(x_ref, t_ref, out_ref, *, alpha, gamma, tb, n_rows, mask_rows):
    """Per-block partial sum: writes an (8, C) slab whose row 0 holds the sum."""
    loss = _focal_loss_elem(
        x_ref[...].astype(jnp.float32),
        t_ref[...].astype(jnp.float32),
        alpha, gamma,
    )
    if mask_rows:
        # Ragged last row-block: zero out contributions from out-of-bounds rows.
        row0 = pl.program_id(0) * tb
        rows = row0 + jax.lax.broadcasted_iota(jnp.int32, loss.shape, 0)
        loss = jnp.where(rows < n_rows, loss, 0.0)
    c = loss.shape[-1]
    col_sum = jnp.sum(loss, axis=0, keepdims=True)          # (1, C): cheap row reduce
    rows8 = jax.lax.broadcasted_iota(jnp.int32, (8, c), 0)
    out_ref[...] = jnp.where(rows8 == 0, col_sum, 0.0)       # partial-sum slab


def _focal_none_kernel(x_ref, t_ref, out_ref, *, alpha, gamma):
    out_ref[...] = _focal_loss_elem(
        x_ref[...].astype(jnp.float32),
        t_ref[...].astype(jnp.float32),
        alpha, gamma,
    ).astype(out_ref.dtype)


def _tile_rows(n_rows, n_cols):
    """Rows per tile: ~2 MiB f32 (lane-padded) per buffer, multiple of 32."""
    c_pad = _round_up(max(n_cols, 1), _LANE)
    max_rows = (_TILE_F32_BYTES // (c_pad * 4)) // _SUBLANE * _SUBLANE
    max_rows = max(_SUBLANE, min(max_rows, _MAX_TB))
    if n_rows <= max_rows:
        return n_rows, 1          # single block == full array (any size legal)
    return max_rows, _cdiv(n_rows, max_rows)


def focal_loss(logits, targets, alpha=0.25, gamma=2.0, reduction="mean",
               block_rows=None):
    """Pallas implementation of FocalLoss.forward.

    logits:  probabilities in [0, 1], shape (batch, num_classes)
    targets: binary labels {0, 1}, same shape
    """
    assert logits.shape == targets.shape
    orig_shape = logits.shape
    if logits.ndim == 2:
        x2, t2 = logits, targets
    else:
        last = orig_shape[-1] if logits.ndim >= 1 else 1
        x2 = logits.reshape(-1, last)
        t2 = targets.reshape(-1, last)
    n_rows, n_cols = x2.shape
    n_elems = n_rows * n_cols

    if block_rows is None:
        tb, nrt = _tile_rows(n_rows, n_cols)
    else:
        tb = int(block_rows)
        nrt = _cdiv(n_rows, tb)
    mask_rows = (nrt > 1) and (n_rows % tb != 0)

    compiler_params = pltpu.CompilerParams(
        dimension_semantics=("parallel",),
        vmem_limit_bytes=_VMEM_LIMIT,
    )
    in_specs = [
        pl.BlockSpec((tb, n_cols), lambda i: (i, 0)),
        pl.BlockSpec((tb, n_cols), lambda i: (i, 0)),
    ]

    if reduction in ("mean", "sum"):
        kernel = functools.partial(
            _focal_sum_kernel, alpha=float(alpha), gamma=float(gamma),
            tb=tb, n_rows=n_rows, mask_rows=mask_rows,
        )
        partials = pl.pallas_call(
            kernel,
            out_shape=jax.ShapeDtypeStruct((nrt * 8, n_cols), jnp.float32),
            grid=(nrt,),
            in_specs=in_specs,
            out_specs=pl.BlockSpec((8, n_cols), lambda i: (i, 0)),
            compiler_params=compiler_params,
        )(x2, t2)
        total = jnp.sum(partials)            # tiny finalize: <= 1/64 of the input
        if reduction == "mean":
            total = total / float(n_elems)
        return total

    elif reduction == "none":
        kernel = functools.partial(
            _focal_none_kernel, alpha=float(alpha), gamma=float(gamma)
        )
        out = pl.pallas_call(
            kernel,
            out_shape=jax.ShapeDtypeStruct((n_rows, n_cols), x2.dtype),
            grid=(nrt,),
            in_specs=in_specs,
            out_specs=pl.BlockSpec((tb, n_cols), lambda i: (i, 0)),
            compiler_params=compiler_params,
        )(x2, t2)
        return out if out.shape == orig_shape else out.reshape(orig_shape)

    else:
        raise ValueError(f"unknown reduction: {reduction}")


def _focal_loss_ref(logits, targets, alpha=0.25, gamma=2.0, reduction="mean"):
    p = logits.astype(jnp.float32)
    t = targets.astype(jnp.float32)
    p_t = p * t + (1 - p) * (1 - t)
    alpha_t = alpha * t + (1 - alpha) * (1 - t)
    focal_weight = (1 - p_t) ** gamma
    loss = -alpha_t * focal_weight * jnp.log(jnp.clip(p_t, 1e-8))
    if reduction == "mean":
        return loss.mean()
    elif reduction == "sum":
        return loss.sum()
    return loss


if __name__ == "__main__":
    key = jax.random.PRNGKey(0)
    k1, k2, k3, k4 = jax.random.split(key, 4)

    batch, num_classes = 8, 16
    # Module expects probabilities as input, so sample in [0, 1].
    logits = jax.random.uniform(k1, (batch, num_classes), dtype=jnp.float32)
    targets = jax.random.bernoulli(k2, p=0.3, shape=(batch, num_classes)).astype(
        jnp.float32
    )

    out_mean = jax.block_until_ready(
        focal_loss(logits, targets, 0.25, 2.0, reduction="mean"))
    out_sum = jax.block_until_ready(
        focal_loss(logits, targets, 0.25, 2.0, reduction="sum"))
    out_none = jax.block_until_ready(
        focal_loss(logits, targets, 0.25, 2.0, reduction="none"))

    ref_mean = _focal_loss_ref(logits, targets, reduction="mean")
    ref_sum = _focal_loss_ref(logits, targets, reduction="sum")
    ref_none = _focal_loss_ref(logits, targets, reduction="none")

    assert jnp.allclose(out_mean, ref_mean, rtol=1e-5, atol=1e-6), (out_mean, ref_mean)
    assert jnp.allclose(out_sum, ref_sum, rtol=1e-5, atol=1e-5), (out_sum, ref_sum)
    assert jnp.allclose(out_none, ref_none, rtol=1e-5, atol=1e-6)

    # Exercise the multi-tile + ragged last-block path (forced small tile).
    b2, c2 = 80, 16
    lg2 = jax.random.uniform(k3, (b2, c2), dtype=jnp.float32)
    tg2 = jax.random.bernoulli(k4, p=0.5, shape=(b2, c2)).astype(jnp.float32)
    out2 = jax.block_until_ready(
        focal_loss(lg2, tg2, 0.25, 2.0, reduction="mean", block_rows=32))
    ref2 = _focal_loss_ref(lg2, tg2, reduction="mean")
    assert jnp.allclose(out2, ref2, rtol=1e-5, atol=1e-6), (out2, ref2)

    print("KERNEL_OK")
</pallas_src>

<mosaic_0001>
module attributes {stable_mosaic.version = 11 : i64} {
  func.func @_focal_sum_kernel(%arg0: i32, %arg1: memref<8x16xf32, #tpu.memory_space<vmem>>, %arg2: memref<8x16xf32, #tpu.memory_space<vmem>>, %arg3: memref<8x16xf32, #tpu.memory_space<vmem>>) attributes {dimension_semantics = [#tpu.dimension_semantics<parallel>], iteration_bounds = array<i64: 1>, scalar_prefetch = 0 : i64, scratch_operands = 0 : i64, tpu.core_type = #tpu.core_type<tc>, window_params = [{transform_indices = @transform_0, window_bounds = array<i64: 8, 16>}, {transform_indices = @transform_1, window_bounds = array<i64: 8, 16>}, {transform_indices = @transform_2, window_bounds = array<i64: 8, 16>}]} {
    %c0 = arith.constant 0 : index
    %c0_0 = arith.constant 0 : index
    %0 = vector.load %arg1[%c0, %c0_0] : memref<8x16xf32, #tpu.memory_space<vmem>>, vector<8x16xf32>
    %c0_1 = arith.constant 0 : index
    %c0_2 = arith.constant 0 : index
    %1 = vector.load %arg2[%c0_1, %c0_2] : memref<8x16xf32, #tpu.memory_space<vmem>>, vector<8x16xf32>
    %2 = arith.addf %0, %1 : vector<8x16xf32>
    %3 = arith.mulf %0, %1 : vector<8x16xf32>
    %cst = arith.constant 2.000000e+00 : f32
    %4 = vector.broadcast %cst : f32 to vector<8x16xf32>
    %5 = arith.mulf %4, %3 : vector<8x16xf32>
    %6 = arith.subf %2, %5 : vector<8x16xf32>
    %cst_3 = arith.constant 1.000000e+00 : f32
    %7 = vector.broadcast %cst_3 : f32 to vector<8x16xf32>
    %8 = arith.subf %7, %6 : vector<8x16xf32>
    %9 = arith.mulf %6, %6 : vector<8x16xf32>
    %cst_4 = arith.constant 5.000000e-01 : f32
    %10 = vector.broadcast %cst_4 : f32 to vector<8x16xf32>
    %11 = arith.mulf %10, %1 : vector<8x16xf32>
    %cst_5 = arith.constant -7.500000e-01 : f32
    %12 = vector.broadcast %cst_5 : f32 to vector<8x16xf32>
    %13 = arith.addf %12, %11 : vector<8x16xf32>
    %cst_6 = arith.constant 9.99999993E-9 : f32
    %14 = vector.broadcast %cst_6 : f32 to vector<8x16xf32>
    %15 = arith.maximumf %8, %14 : vector<8x16xf32>
    %16 = math.log %15 : vector<8x16xf32>
    %17 = arith.mulf %13, %9 : vector<8x16xf32>
    %18 = arith.mulf %17, %16 : vector<8x16xf32>
    %cst_7 = arith.constant dense<0.000000e+00> : vector<16xf32>
    %19 = vector.multi_reduction <add>, %18, %cst_7 [0] : vector<8x16xf32> to vector<16xf32>
    %20 = vector.shape_cast %19 : vector<16xf32> to vector<1x16xf32>
    %21 = tpu.iota {dimensions = array<i32: 0>} : vector<8x16xi32>
    %c0_i32 = arith.constant 0 : i32
    %22 = vector.broadcast %c0_i32 : i32 to vector<8x16xi32>
    %23 = arith.cmpi eq, %21, %22 : vector<8x16xi32>
    %cst_8 = arith.constant 0.000000e+00 : f32
    %24 = vector.shape_cast %20 : vector<1x16xf32> to vector<1x16xf32>
    %25 = vector.broadcast %24 : vector<1x16xf32> to vector<8x16xf32>
    %26 = vector.broadcast %cst_8 : f32 to vector<8x16xf32>
    %27 = arith.select %23, %25, %26 : vector<8x16xi1>, vector<8x16xf32>
    %c0_9 = arith.constant 0 : index
    %c0_10 = arith.constant 0 : index
    %28 = vector.load %arg3[%c0_9, %c0_10] : memref<8x16xf32, #tpu.memory_space<vmem>>, vector<8x16xf32>
    tpu.vector_store %arg3[%c0_9, %c0_10], %27 {strides = array<i32>} : memref<8x16xf32, #tpu.memory_space<vmem>>, vector<8x16xf32>,
    return
  }
  func.func @transform_0(%arg0: i32) -> (i32, i32) {
    %c0_i32 = arith.constant 0 : i32
    %c0_i32_0 = arith.constant 0 : i32
    return %arg0, %c0_i32 : i32, i32
  }
  func.func @transform_1(%arg0: i32) -> (i32, i32) {
    %c0_i32 = arith.constant 0 : i32
    %c0_i32_0 = arith.constant 0 : i32
    return %arg0, %c0_i32 : i32, i32
  }
  func.func @transform_2(%arg0: i32) -> (i32, i32) {
    %c0_i32 = arith.constant 0 : i32
    %c0_i32_0 = arith.constant 0 : i32
    return %arg0, %c0_i32 : i32, i32
  }
}

</mosaic_0001>

<llo_original>
// kernel: tpu_custom_call.1
$region0: #{tpu_custom_call.1}
  #allocation0 [shape = 'u32[]', space=smem, size = 0x4, offset = 0x4, fixed_abs, tag = 'smem constant byte address 0x4 - core index']
  #allocation1 [shape = 'u32[144,128]{1,0:T(1,128)}', space=vmem, size = 0x12000, scoped, tag = 'internal scratch']
  %s0 = inlined_call_operand.hbm [shape: f32[8,16], index: 0, kind: input, shape index: {}]
  %s1 = inlined_call_operand.hbm [shape: f32[8,16], index: 1, kind: input, shape index: {}]
  %s2 = inlined_call_operand.hbm [shape: f32[8,16], index: 2, kind: output, shape index: {}]
  %s3 = sld [smem:[#allocation0]]
  $region26: #{tpu_custom_call.1} parent=0
    _
  %s5 = ssub.s32 1, %s3
  %s6 = scalar_select 0, %s5, %s3
  $region1: #{tpu_custom_call.1} parent=0
    #allocation2 [shape = 'u8[4096]{0}', space=vmem, size = 0x1000, scoped, tag = 'input window, operand 0, single buffered']
    #allocation3 [shape = 's32[1]{0}', space=sflag, size = 0x4, scoped, tag = 'scoped memory for tpu_custom_call.1']
    #allocation4 [shape = 's32[1]{0}', space=sflag, size = 0x4, scoped, tag = 'scoped memory for tpu_custom_call.1']
    #allocation5 [shape = 'u8[4096]{0}', space=vmem, size = 0x1000, scoped, tag = 'input window, operand 1, single buffered']
    #allocation6 [shape = 's32[1]{0}', space=sflag, size = 0x4, scoped, tag = 'scoped memory for tpu_custom_call.1']
    #allocation7 [shape = 'u8[4096]{0}', space=vmem, size = 0x1000, scoped, tag = 'output window, operand 0, single buffered']
    %7 = vsyncpa [#allocation3], 0
    %8 = vsyncpa [#allocation6], 0
    %9 = vsyncpa [#allocation4], 0
    // Predicated region
    $region2: #{tpu_custom_call.1} parent=1 // pred_check
      _
    $region3: #{tpu_custom_call.1} parent=1 // pred_check_branch
      %11 = sbr.rel (0) target = $region5
    $region4: #{tpu_custom_call.1} parent=1 // pred_region
      %s13 = ssub.s32 128, 128
      %14 = vsyncadd [#allocation3], %s13
      %s16 = sshll.u32 [#allocation2], 4
      %s17 = int_to_ptr.vmem [resolvable:$true] %s16
      %19 = dma.hbm_to_vmem [thread:$0]  %s0, 128, %s17, [#allocation3]
    $region5: #{tpu_custom_call.1} parent=1 // pred_fallthru
      _
    // Predicated region
    $region6: #{tpu_custom_call.1} parent=1 // pred_check
      _
    $region7: #{tpu_custom_call.1} parent=1 // pred_check_branch
      %21 = sbr.rel (0) target = $region9
    $region8: #{tpu_custom_call.1} parent=1 // pred_region
      %s23 = ssub.s32 128, 128
      %24 = vsyncadd [#allocation6], %s23
      %s26 = sshll.u32 [#allocation5], 4
      %s27 = int_to_ptr.vmem [resolvable:$true] %s26
      %29 = dma.hbm_to_vmem [thread:$0]  %s1, 128, %s27, [#allocation6]
    $region9: #{tpu_custom_call.1} parent=1 // pred_fallthru
      _
    // Predicated region
    $region10: #{tpu_custom_call.1} parent=1 // pred_check
      _
    $region11: #{tpu_custom_call.1} parent=1 // pred_check_branch
      %31 = sbr.rel (0) target = $region13
    $region12: #{tpu_custom_call.1} parent=1 // pred_region
      %32 = dma.done [#allocation3], 128
    $region13: #{tpu_custom_call.1} parent=1 // pred_fallthru
      _
    // Predicated region
    $region14: #{tpu_custom_call.1} parent=1 // pred_check
      _
    $region15: #{tpu_custom_call.1} parent=1 // pred_check_branch
      %34 = sbr.rel (0) target = $region17
    $region16: #{tpu_custom_call.1} parent=1 // pred_region
      %35 = dma.done [#allocation6], 128
    $region17: #{tpu_custom_call.1} parent=1 // pred_fallthru
      _
    %v36 = vld [vmem:[#allocation2] sm:$0xff]
    %v37 = vld [vmem:[#allocation5] sm:$0xff]
    %v38 = vadd.f32 %v36, %v37
    %v39 = vmul.f32 %v36, %v37
    %v40 = vmul.f32 %v39, 2.0
    %v41 = vsub.f32 %v38, %v40
    %v42 = vsub.f32 1.0, %v41
    %v43 = vmul.f32 %v41, %v41
    %v44 = vmul.f32 %v37, 0.5
    %v45 = vadd.f32 %v44, -0.75
    %v46 = vmax.f32 %v42, 1e-08
    %v47 = vlog2.pop %v46
    %v48 = vmul.f32 %v47, 0.6931472
    %v49 = vmul.f32 %v45, %v43
    %v50 = vmul.f32 %v49, %v48
    %vm51 = vcmask 130048
    %v52 = vsel %vm51, %v50, 0.0
    %v53 = vrot.slane %v52, 4
    %v54 = vadd.f32 %v52, %v53
    %v55 = vrot.slane %v54, 2
    %v56 = vadd.f32 %v54, %v55
    %v57 = vrot.slane %v56, 1
    %v58 = vadd.f32 %v56, %v57
    %v59 = vlaneseq
    %v60 = vshrl.u32 %v59, 7
    %vm61 = vcmp.eq.s32.totalorder %v60, 0
    %v62 = vsel %vm61, %v58, 0.0
    %63 = vst.msk [vmem:[#allocation7] sm:$0xff] %vm51, %v62
    // Predicated region
    $region18: #{tpu_custom_call.1} parent=1 // pred_check
      _
    $region19: #{tpu_custom_call.1} parent=1 // pred_check_branch
      %65 = sbr.rel (0) target = $region21
    $region20: #{tpu_custom_call.1} parent=1 // pred_region
      %s67 = ssub.s32 128, 128
      %68 = vsyncadd [#allocation4], %s67
      %s70 = sshll.u32 [#allocation7], 4
      %s71 = int_to_ptr.vmem [resolvable:$true] %s70
      %73 = dma.vmem_to_hbm [thread:$0]  %s71, 128, %s2, [#allocation4]
    $region21: #{tpu_custom_call.1} parent=1 // pred_fallthru
      _
    // Predicated region
    $region22: #{tpu_custom_call.1} parent=1 // pred_check
      _
    $region23: #{tpu_custom_call.1} parent=1 // pred_check_branch
      %75 = sbr.rel (0) target = $region25
    $region24: #{tpu_custom_call.1} parent=1 // pred_region
      %76 = dma.done [#allocation4], 128
    $region25: #{tpu_custom_call.1} parent=1 // pred_fallthru
      _
    %77 = vsyncpa [#allocation3], 1
    %78 = vsyncpa [#allocation6], 1
    %79 = vsyncpa [#allocation4], 1

</llo_original>
